<compile_context>
chip_gen: v6e
topology: v6e:2x2x1
jax: 0.10.0
libtpu: 0.0.40
codegen_flags: <defaults>
</compile_context>

<pallas_src>
import jax
import jax.numpy as jnp
from jax.experimental import pallas as pl
from jax.experimental.pallas import tpu as pltpu

_LANE = 128
_SUBLANE = 8
_TN_MAX = 4096                         # lanes per block (multiple of 128)
_TM_MAX = 1024                         # rows per block cap (multiple of 8)
_TARGET_BLOCK_BYTES = 4 * 1024 * 1024  # ~4 MiB/buffer: amortizes per-step overhead
_MIN_GRID_BLOCKS = 4                   # >= 2 blocks per v7x core + pipelining
_BIG_ENOUGH_BYTES = 1 << 20            # only enforce the block-count floor >= 1 MiB


def _normalize_kernel(x_ref, stats_ref, o_ref):
    # x_ref / o_ref : VMEM (TM, TN)
    # stats_ref     : VMEM (2, TM, 1) f32 -> [0] = per-row mean, [1] = per-row 1/sd
    mean = stats_ref[0]   # (TM, 1), broadcasts across lanes on the VPU
    inv = stats_ref[1]    # (TM, 1)
    o_ref[...] = ((x_ref[...] - mean) * inv).astype(o_ref.dtype)


def _round_down(x: int, m: int) -> int:
    return max(m, (x // m) * m)


def _choose_tiles(R: int, L: int, itemsize: int):
    # Lane tile: full extent (always legal) when small, else a 128-multiple cap
    # so stores stay lane-dense (unmasked vst).
    TN = L if L <= _TN_MAX else _TN_MAX

    # Row tile: target ~_TARGET_BLOCK_BYTES per (TM, TN) buffer.
    budget_rows = max(_SUBLANE, _TARGET_BLOCK_BYTES // max(1, TN * itemsize))
    if R <= budget_rows:
        TM = R                                            # full extent is legal
    else:
        TM = min(_round_down(budget_rows, _SUBLANE), _TM_MAX)

    def nblocks(tm, tn):
        return pl.cdiv(R, tm) * pl.cdiv(L, tn)

    # Avoid degenerate (near-)single-block grids for big-enough tensors so the
    # software pipeline has something to overlap and v7x can shard across cores.
    if R * L * itemsize >= _BIG_ENOUGH_BYTES:
        # Prefer splitting rows (outer axis; keeps per-row-tile stats reuse).
        while nblocks(TM, TN) < _MIN_GRID_BLOCKS and TM > _SUBLANE:
            TM = _round_down(max(_SUBLANE, TM // 2), _SUBLANE)
        while nblocks(TM, TN) < _MIN_GRID_BLOCKS and TN > _LANE:
            TN = _round_down(max(_LANE, TN // 2), _LANE)

    return TM, TN


def normalize_layer(x: jax.Array, means: jax.Array, sds: jax.Array) -> jax.Array:
    """(x - means[c]) / sds[c] with NCHW broadcasting, computed in Pallas."""
    B, C, H, W = x.shape
    R, L = B * C, H * W

    # Lane-dense 2D view of the problem (last dim = H*W maps onto lanes).
    x2 = x.reshape(R, L)

    # Per-row stats fused into a single side input: row r is channel (r % C).
    means_f = means.astype(jnp.float32)
    inv_sds = (1.0 / sds).astype(jnp.float32)
    stats = jnp.stack([jnp.tile(means_f, B), jnp.tile(inv_sds, B)], axis=0)
    stats = stats.reshape(2, R, 1)

    itemsize = jnp.dtype(x.dtype).itemsize
    TM, TN = _choose_tiles(R, L, itemsize)
    # Rows outer, lanes inner: stats block index (0, i, 0) is constant across
    # the inner j loop, so its tile is not re-DMA'd every grid step.
    grid = (pl.cdiv(R, TM), pl.cdiv(L, TN))

    # Explicit VMEM budget: double-buffered x tile + double-buffered out tile +
    # double-buffered stats tile + headroom.  ~18 MiB worst case with 4 MiB
    # buffers -> inside v7x's 64 MiB physical VMEM, and explicitly overrides
    # v5e's 16 MiB scoped default (v5e physical VMEM is 128 MiB).
    buf_bytes = TM * TN * itemsize
    stats_bytes = 2 * pl.cdiv(TM, _SUBLANE) * _SUBLANE * _LANE * 4
    vmem_limit = int(4 * buf_bytes + 2 * stats_bytes + (2 << 20))
    vmem_limit = max(vmem_limit, 8 << 20)

    cost = pl.CostEstimate(
        flops=2 * R * L,                      # one sub + one mul per element
        transcendentals=0,
        bytes_accessed=2 * R * L * itemsize,  # read x + write out (stats negligible)
    )

    out2 = pl.pallas_call(
        _normalize_kernel,
        out_shape=jax.ShapeDtypeStruct((R, L), x.dtype),
        grid=grid,
        in_specs=[
            pl.BlockSpec((TM, TN), lambda i, j: (i, j)),       # x tile
            pl.BlockSpec((2, TM, 1), lambda i, j: (0, i, 0)),  # per-row [mean, 1/sd]
        ],
        out_specs=pl.BlockSpec((TM, TN), lambda i, j: (i, j)),
        compiler_params=pltpu.CompilerParams(
            dimension_semantics=("parallel", "parallel"),
            vmem_limit_bytes=vmem_limit,
        ),
        cost_estimate=cost,
    )(x2, stats)

    return out2.reshape(B, C, H, W)


if __name__ == "__main__":
    key = jax.random.PRNGKey(0)
    B, C, H, W = 2, 4, 16, 16

    # Deterministic "dataset statistics" (synthetic, per-channel).
    means = jnp.array([0.485, 0.456, 0.406, 0.500], dtype=jnp.float32)
    sds = jnp.array([0.229, 0.224, 0.225, 0.250], dtype=jnp.float32)

    x = jax.random.normal(key, (B, C, H, W), dtype=jnp.float32)

    out = normalize_layer(x, means, sds)
    out = jax.block_until_ready(out)

    # Reference (plain JAX) check of exact forward semantics.
    ref = (x - means[None, :, None, None]) / sds[None, :, None, None]
    assert out.shape == (B, C, H, W)
    assert out.dtype == x.dtype
    # Reciprocal-multiply vs divide differs by a couple of ulps at most.
    assert jnp.allclose(out, ref, atol=1e-5, rtol=1e-5)

    print("KERNEL_OK")
</pallas_src>

<mosaic_0001>
module attributes {stable_mosaic.version = 11 : i64} {
  func.func @_normalize_kernel(%arg0: i32, %arg1: i32, %arg2: memref<8x256xf32, #tpu.memory_space<vmem>>, %arg3: memref<2x8x1xf32, #tpu.memory_space<vmem>>, %arg4: memref<8x256xf32, #tpu.memory_space<vmem>>) attributes {dimension_semantics = [#tpu.dimension_semantics<parallel>, #tpu.dimension_semantics<parallel>], iteration_bounds = array<i64: 1, 1>, scalar_prefetch = 0 : i64, scratch_operands = 0 : i64, tpu.core_type = #tpu.core_type<tc>, window_params = [{transform_indices = @transform_0, window_bounds = array<i64: 8, 256>}, {transform_indices = @transform_1, window_bounds = array<i64: 2, 8, 1>}, {transform_indices = @transform_2, window_bounds = array<i64: 8, 256>}]} {
    %c0 = arith.constant 0 : index
    %c0_0 = arith.constant 0 : index
    %c0_1 = arith.constant 0 : index
    %0 = vector.load %arg3[%c0, %c0_0, %c0_1] : memref<2x8x1xf32, #tpu.memory_space<vmem>>, vector<1x8x1xf32>
    %1 = vector.shape_cast %0 : vector<1x8x1xf32> to vector<8x1xf32>
    %c1 = arith.constant 1 : index
    %c0_2 = arith.constant 0 : index
    %c0_3 = arith.constant 0 : index
    %2 = vector.load %arg3[%c1, %c0_2, %c0_3] : memref<2x8x1xf32, #tpu.memory_space<vmem>>, vector<1x8x1xf32>
    %3 = vector.shape_cast %2 : vector<1x8x1xf32> to vector<8x1xf32>
    %c0_4 = arith.constant 0 : index
    %c0_5 = arith.constant 0 : index
    %4 = vector.load %arg2[%c0_4, %c0_5] : memref<8x256xf32, #tpu.memory_space<vmem>>, vector<8x256xf32>
    %5 = vector.broadcast %1 : vector<8x1xf32> to vector<8x256xf32>
    %6 = arith.subf %4, %5 : vector<8x256xf32>
    %7 = vector.broadcast %3 : vector<8x1xf32> to vector<8x256xf32>
    %8 = arith.mulf %6, %7 : vector<8x256xf32>
    %c0_6 = arith.constant 0 : index
    %c0_7 = arith.constant 0 : index
    %9 = vector.load %arg4[%c0_6, %c0_7] : memref<8x256xf32, #tpu.memory_space<vmem>>, vector<8x256xf32>
    tpu.vector_store %arg4[%c0_6, %c0_7], %8 {strides = array<i32>} : memref<8x256xf32, #tpu.memory_space<vmem>>, vector<8x256xf32>,
    return
  }
  func.func @transform_0(%arg0: i32, %arg1: i32) -> (i32, i32) {
    %c0_i32 = arith.constant 0 : i32
    return %arg0, %arg1 : i32, i32
  }
  func.func @transform_1(%arg0: i32, %arg1: i32) -> (i32, i32, i32) {
    %c0_i32 = arith.constant 0 : i32
    %c0_i32_0 = arith.constant 0 : i32
    %c0_i32_1 = arith.constant 0 : i32
    return %c0_i32, %arg0, %c0_i32_0 : i32, i32, i32
  }
  func.func @transform_2(%arg0: i32, %arg1: i32) -> (i32, i32) {
    %c0_i32 = arith.constant 0 : i32
    return %arg0, %arg1 : i32, i32
  }
}

</mosaic_0001>

<llo_original>
// kernel: tpu_custom_call.1
$region0: #{tpu_custom_call.1}
  #allocation0 [shape = 'u32[]', space=smem, size = 0x4, offset = 0x4, fixed_abs, tag = 'smem constant byte address 0x4 - core index']
  #allocation1 [shape = 'u32[144,128]{1,0:T(1,128)}', space=vmem, size = 0x12000, scoped, tag = 'internal scratch']
  %s0 = inlined_call_operand.vmem [shape: f32[8,256], index: 0, kind: input, shape index: {}]
  %s1 = inlined_call_operand.vmem [shape: f32[2,8,1], index: 1, kind: input, shape index: {}]
  %s2 = inlined_call_operand.hbm [shape: f32[8,256], index: 2, kind: output, shape index: {}]
  %s3 = sld [smem:[#allocation0]]
  $region18: #{tpu_custom_call.1} parent=0
    _
  %s5 = ssub.s32 1, %s3
  %s6 = scalar_select 0, %s5, %s3
  $region1: #{tpu_custom_call.1} parent=0
    #allocation2 [shape = 'u8[8192]{0}', space=vmem, size = 0x2000, scoped, tag = 'output window, operand 0, single buffered']
    #allocation3 [shape = 's32[1]{0}', space=sflag, size = 0x4, scoped, tag = 'scoped memory for tpu_custom_call.1']
    %7 = vsyncpa [#allocation3], 0
    // Predicated region
    $region2: #{tpu_custom_call.1} parent=1 // pred_check
      _
    $region3: #{tpu_custom_call.1} parent=1 // pred_check_branch
      %9 = sbr.rel (0) target = $region5
    $region4: #{tpu_custom_call.1} parent=1 // pred_region
      _
    $region5: #{tpu_custom_call.1} parent=1 // pred_fallthru
      _
    // Predicated region
    $region6: #{tpu_custom_call.1} parent=1 // pred_check
      _
    $region7: #{tpu_custom_call.1} parent=1 // pred_check_branch
      %11 = sbr.rel (0) target = $region9
    $region8: #{tpu_custom_call.1} parent=1 // pred_region
      _
    $region9: #{tpu_custom_call.1} parent=1 // pred_fallthru
      _
    %v12 = vld [vmem:[%s1] sm:$0xff]
    %s13 = scalar_lea.vmem %s1, 8
    %v14 = vld [vmem:[%s13] sm:$0xff]
    %v15 = vld [vmem:[%s0] sm:$0xff]
    %v16 = vld [vmem:[%s0 + $0x8] sm:$0xff]
    %18 = vset.pattern.permute.xlu0 0
    %19 = vperm.xlu0 %18, %v12
    %v20 = vpop.permute.xlu0 %19
    %v22 = vsub.f32 %v15, %v20
    %v23 = vsub.f32 %v16, %v20
    %25 = vset.pattern.permute.xlu0 0
    %26 = vperm.xlu0 %25, %v14
    %v27 = vpop.permute.xlu0 %26
    %v29 = vmul.f32 %v22, %v27
    %v30 = vmul.f32 %v23, %v27
    %31 = vst [vmem:[#allocation2] sm:$0xff] %v29
    %32 = vst [vmem:[#allocation2 + $0x8] sm:$0xff] %v30
    // Predicated region
    $region10: #{tpu_custom_call.1} parent=1 // pred_check
      _
    $region11: #{tpu_custom_call.1} parent=1 // pred_check_branch
      %34 = sbr.rel (0) target = $region13
    $region12: #{tpu_custom_call.1} parent=1 // pred_region
      %s36 = ssub.s32 256, 256
      %37 = vsyncadd [#allocation3], %s36
      %s39 = sshll.u32 [#allocation2], 4
      %s40 = int_to_ptr.vmem [resolvable:$true] %s39
      %42 = dma.vmem_to_hbm [thread:$0]  %s40, 256, %s2, [#allocation3]
    $region13: #{tpu_custom_call.1} parent=1 // pred_fallthru
      _
    // Predicated region
    $region14: #{tpu_custom_call.1} parent=1 // pred_check
      _
    $region15: #{tpu_custom_call.1} parent=1 // pred_check_branch
      %44 = sbr.rel (0) target = $region17
    $region16: #{tpu_custom_call.1} parent=1 // pred_region
      %45 = dma.done [#allocation3], 256
    $region17: #{tpu_custom_call.1} parent=1 // pred_fallthru
      _
    %46 = vsyncpa [#allocation3], 1

</llo_original>
